<compile_context>
chip_gen: v7x
topology: tpu7x:2x2x1
jax: 0.10.0
libtpu: 0.0.40
codegen_flags: <defaults>
</compile_context>

<pallas_src>
import jax
import jax.numpy as jnp
from jax.experimental import pallas as pl
from jax.experimental.pallas import tpu as pltpu


def _round_up(x, m):
    return (x + m - 1) // m * m


def _dense_layer_kernel(x_ref, w_ref, b_ref, o_ref, acc_ref):
    # Grid = (e, n, m, k).  Blocks:
    #   x_ref: (1, tm, tk)   w_ref: (1, tk, tn)   b_ref: (1, 1, tn)
    #   o_ref: (1, tm, tn)   acc_ref: (tm, tn) f32 scratch
    k = pl.program_id(3)

    @pl.when(k == 0)
    def _():
        acc_ref[...] = jnp.zeros_like(acc_ref)

    acc_ref[...] += jnp.dot(x_ref[0], w_ref[0],
                            preferred_element_type=jnp.float32)

    @pl.when(k == pl.num_programs(3) - 1)
    def _():
        # Epilogue (bias + relu) kept in f32 regardless of matmul dtype.
        y = acc_ref[...] + b_ref[0]
        o_ref[0] = jnp.maximum(y, 0.0).astype(o_ref.dtype)


def dense_layer_forward(x, weights, biases, *, use_bf16_matmul=False):
    """x: (E, B, I); weights: (E, I, O); biases: (E, 1, O). Returns (E, B, O)."""
    E, B, I = x.shape
    O = weights.shape[-1]
    out_dtype = x.dtype

    # MXU / lane-friendly tile sizes.
    tm = min(_round_up(B, 8), 128)          # sublane-aligned batch tile
    tn = min(_round_up(O, 128), 256)        # lane-dense output tile
    tk = min(_round_up(I, 128), 512)        # reduction tile
    M_pad = _round_up(B, tm)
    N_pad = _round_up(O, tn)
    K_pad = _round_up(I, tk)

    # Zero-pad to tile multiples (padded K rows/cols contribute 0 to the dot;
    # padded M/N are sliced off after the call).
    x_p = jnp.pad(x, ((0, 0), (0, M_pad - B), (0, K_pad - I)))
    w_p = jnp.pad(weights, ((0, 0), (0, K_pad - I), (0, N_pad - O)))
    b_p = jnp.pad(biases, ((0, 0), (0, 0), (0, N_pad - O)))

    if use_bf16_matmul:
        # MXU inputs in bf16; accumulation / bias / relu stay f32 in-kernel.
        x_p = x_p.astype(jnp.bfloat16)
        w_p = w_p.astype(jnp.bfloat16)

    grid = (E, N_pad // tn, M_pad // tm, K_pad // tk)

    out_padded = pl.pallas_call(
        _dense_layer_kernel,
        out_shape=jax.ShapeDtypeStruct((E, M_pad, N_pad), out_dtype),
        grid_spec=pltpu.PrefetchScalarGridSpec(
            num_scalar_prefetch=0,
            grid=grid,
            in_specs=[
                # x tile depends on (e, m, k) only
                pl.BlockSpec((1, tm, tk), lambda e, n, m, k: (e, m, k)),
                # weight tile independent of m -> stays resident across batch
                # tiles when K_pad == tk
                pl.BlockSpec((1, tk, tn), lambda e, n, m, k: (e, k, n)),
                # bias tile independent of m and k
                pl.BlockSpec((1, 1, tn), lambda e, n, m, k: (e, 0, n)),
            ],
            out_specs=pl.BlockSpec((1, tm, tn), lambda e, n, m, k: (e, m, n)),
            scratch_shapes=[pltpu.VMEM((tm, tn), jnp.float32)],
        ),
        compiler_params=pltpu.CompilerParams(
            dimension_semantics=("parallel", "parallel", "parallel",
                                 "arbitrary")),
    )(x_p, w_p, b_p)

    return out_padded[:, :B, :O]


def fanin_init(key, shape):
    # ptu.fanin_init: uniform(-1/sqrt(fan_in), 1/sqrt(fan_in)), fan_in = shape[0]
    fan_in = shape[0]
    bound = 1.0 / jnp.sqrt(fan_in)
    return jax.random.uniform(key, shape, jnp.float32, -bound, bound)


def make_params(key, ensemble_size, input_dim, output_dim, bias_const=0.0):
    keys = jax.random.split(key, ensemble_size)
    weights = jnp.stack(
        [fanin_init(k, (input_dim, output_dim)) for k in keys], axis=0)
    biases = jnp.full((ensemble_size, 1, output_dim), bias_const, jnp.float32)
    return weights, biases


if __name__ == "__main__":
    ensemble_size, batch, input_dim, output_dim = 4, 8, 32, 32

    key = jax.random.PRNGKey(0)
    k_x, k_w = jax.random.split(key)

    x = jax.random.normal(k_x, (ensemble_size, batch, input_dim), jnp.float32)
    weights, biases = make_params(k_w, ensemble_size, input_dim, output_dim)

    out = dense_layer_forward(x, weights, biases)
    out = jax.block_until_ready(out)

    # correctness check against plain-JAX reference
    ref = jnp.maximum(jnp.einsum('bij,bjk->bik', x, weights) + biases, 0.0)
    assert out.shape == (ensemble_size, batch, output_dim)
    assert jnp.allclose(out, ref, atol=1e-5, rtol=1e-5)

    print("KERNEL_OK")
</pallas_src>

<mosaic_0001>
module attributes {stable_mosaic.version = 11 : i64} {
  func.func @_dense_layer_kernel(%arg0: i32, %arg1: i32, %arg2: i32, %arg3: i32, %arg4: memref<1x8x128xf32, #tpu.memory_space<vmem>>, %arg5: memref<1x128x128xf32, #tpu.memory_space<vmem>>, %arg6: memref<1x1x128xf32, #tpu.memory_space<vmem>>, %arg7: memref<1x8x128xf32, #tpu.memory_space<vmem>>, %arg8: memref<8x128xf32, #tpu.memory_space<vmem>>) attributes {dimension_semantics = [#tpu.dimension_semantics<parallel>, #tpu.dimension_semantics<parallel>, #tpu.dimension_semantics<parallel>, #tpu.dimension_semantics<arbitrary>], iteration_bounds = array<i64: 4, 1, 1, 1>, scalar_prefetch = 0 : i64, scratch_operands = 1 : i64, tpu.core_type = #tpu.core_type<tc>, window_params = [{transform_indices = @transform_0, window_bounds = array<i64: 1, 8, 128>}, {transform_indices = @transform_1, window_bounds = array<i64: 1, 128, 128>}, {transform_indices = @transform_2, window_bounds = array<i64: 1, 1, 128>}, {transform_indices = @transform_3, window_bounds = array<i64: 1, 8, 128>}]} {
    %c0_i32 = arith.constant 0 : i32
    %0 = arith.cmpi eq, %arg3, %c0_i32 : i32
    %1 = arith.extui %0 : i1 to i32
    %c0_i32_0 = arith.constant 0 : i32
    %2 = arith.cmpi ne, %1, %c0_i32_0 : i32
    scf.if %2 {
      %cst_12 = arith.constant 0.000000e+00 : f32
      %14 = vector.broadcast %cst_12 : f32 to vector<8x128xf32>
      %c0_13 = arith.constant 0 : index
      %c0_14 = arith.constant 0 : index
      %15 = vector.load %arg8[%c0_13, %c0_14] : memref<8x128xf32, #tpu.memory_space<vmem>>, vector<8x128xf32>
      tpu.vector_store %arg8[%c0_13, %c0_14], %14 {strides = array<i32>} : memref<8x128xf32, #tpu.memory_space<vmem>>, vector<8x128xf32>,
    } else {
    }
    %c0 = arith.constant 0 : index
    %c0_1 = arith.constant 0 : index
    %3 = vector.load %arg8[%c0, %c0_1] : memref<8x128xf32, #tpu.memory_space<vmem>>, vector<8x128xf32>
    %c0_2 = arith.constant 0 : index
    %c0_3 = arith.constant 0 : index
    %c0_4 = arith.constant 0 : index
    %4 = vector.load %arg4[%c0_2, %c0_3, %c0_4] : memref<1x8x128xf32, #tpu.memory_space<vmem>>, vector<1x8x128xf32>
    %5 = vector.shape_cast %4 : vector<1x8x128xf32> to vector<8x128xf32>
    %c0_5 = arith.constant 0 : index
    %c0_6 = arith.constant 0 : index
    %c0_7 = arith.constant 0 : index
    %6 = vector.load %arg5[%c0_5, %c0_6, %c0_7] : memref<1x128x128xf32, #tpu.memory_space<vmem>>, vector<1x128x128xf32>
    %7 = vector.shape_cast %6 : vector<1x128x128xf32> to vector<128x128xf32>
    %cst = arith.constant dense<0.000000e+00> : vector<8x128xf32>
    %8 = tpu.matmul %5, %7, %cst {dimension_numbers = #tpu.dot_dimension_numbers<[1], [0], [0], [1], [0, 0, 1, 1], [], []>} : vector<8x128xf32>, vector<128x128xf32>, vector<8x128xf32> -> vector<8x128xf32>
    %9 = arith.addf %3, %8 : vector<8x128xf32>
    %c0_8 = arith.constant 0 : index
    %c0_9 = arith.constant 0 : index
    %10 = vector.load %arg8[%c0_8, %c0_9] : memref<8x128xf32, #tpu.memory_space<vmem>>, vector<8x128xf32>
    tpu.vector_store %arg8[%c0_8, %c0_9], %9 {strides = array<i32>} : memref<8x128xf32, #tpu.memory_space<vmem>>, vector<8x128xf32>,
    %c0_i32_10 = arith.constant 0 : i32
    %11 = arith.cmpi eq, %arg3, %c0_i32_10 : i32
    %12 = arith.extui %11 : i1 to i32
    %c0_i32_11 = arith.constant 0 : i32
    %13 = arith.cmpi ne, %12, %c0_i32_11 : i32
    scf.if %13 {
      %c0_12 = arith.constant 0 : index
      %c0_13 = arith.constant 0 : index
      %14 = vector.load %arg8[%c0_12, %c0_13] : memref<8x128xf32, #tpu.memory_space<vmem>>, vector<8x128xf32>
      %c0_14 = arith.constant 0 : index
      %c0_15 = arith.constant 0 : index
      %c0_16 = arith.constant 0 : index
      %15 = vector.load %arg6[%c0_14, %c0_15, %c0_16] : memref<1x1x128xf32, #tpu.memory_space<vmem>>, vector<1x1x128xf32>
      %16 = vector.shape_cast %15 : vector<1x1x128xf32> to vector<1x128xf32>
      %17 = vector.broadcast %16 : vector<1x128xf32> to vector<8x128xf32>
      %18 = arith.addf %14, %17 : vector<8x128xf32>
      %cst_17 = arith.constant 0.000000e+00 : f32
      %19 = vector.broadcast %cst_17 : f32 to vector<8x128xf32>
      %20 = arith.maximumf %18, %19 : vector<8x128xf32>
      %c0_18 = arith.constant 0 : index
      %c0_19 = arith.constant 0 : index
      %c0_20 = arith.constant 0 : index
      %21 = vector.load %arg7[%c0_18, %c0_19, %c0_20] : memref<1x8x128xf32, #tpu.memory_space<vmem>>, vector<1x8x128xf32>
      %22 = vector.shape_cast %21 : vector<1x8x128xf32> to vector<8x128xf32>
      %23 = vector.shape_cast %20 : vector<8x128xf32> to vector<1x8x128xf32>
      tpu.vector_store %arg7[%c0_18, %c0_19, %c0_20], %23 {strides = array<i32>} : memref<1x8x128xf32, #tpu.memory_space<vmem>>, vector<1x8x128xf32>,
    } else {
    }
    return
  }
  func.func @transform_0(%arg0: i32, %arg1: i32, %arg2: i32, %arg3: i32) -> (i32, i32, i32) {
    %c0_i32 = arith.constant 0 : i32
    return %arg0, %arg2, %arg3 : i32, i32, i32
  }
  func.func @transform_1(%arg0: i32, %arg1: i32, %arg2: i32, %arg3: i32) -> (i32, i32, i32) {
    %c0_i32 = arith.constant 0 : i32
    return %arg0, %arg3, %arg1 : i32, i32, i32
  }
  func.func @transform_2(%arg0: i32, %arg1: i32, %arg2: i32, %arg3: i32) -> (i32, i32, i32) {
    %c0_i32 = arith.constant 0 : i32
    %c0_i32_0 = arith.constant 0 : i32
    return %arg0, %c0_i32, %arg1 : i32, i32, i32
  }
  func.func @transform_3(%arg0: i32, %arg1: i32, %arg2: i32, %arg3: i32) -> (i32, i32, i32) {
    %c0_i32 = arith.constant 0 : i32
    return %arg0, %arg2, %arg1 : i32, i32, i32
  }
}

</mosaic_0001>

<llo_original>
// kernel: tpu_custom_call.1
$region0: #{tpu_custom_call.1}
  #allocation0 [shape = 'u32[]', space=smem, size = 0x4, offset = 0x4, fixed_abs, tag = 'smem constant byte address 0x4 - core index']
  #allocation1 [shape = 'u32[144,128]{1,0:T(1,128)}', space=vmem, size = 0x12000, scoped, tag = 'internal scratch']
  #allocation2 [shape = 'f32[8,128]{1,0:T(8,128)}', space=vmem, size = 0x1000, scoped, tag = 'scratch operand']
  %s0 = inlined_call_operand.hbm [shape: f32[4,8,128], index: 0, kind: input, shape index: {}]
  %s1 = inlined_call_operand.hbm [shape: f32[4,128,128], index: 1, kind: input, shape index: {}]
  %s2 = inlined_call_operand.vmem [shape: f32[4,1,128], index: 2, kind: input, shape index: {}]
  %s3 = inlined_call_operand.hbm [shape: f32[4,8,128], index: 3, kind: output, shape index: {}]
  %s4 = sld [smem:[#allocation0]]
  $region61: #{tpu_custom_call.1} parent=0
    _
  %s6 = ssub.s32 1, %s4
  %s7 = scalar_select 0, %s6, %s4
  $region1: #{tpu_custom_call.1} parent=0
    #allocation3 [shape = 'u8[8192]{0}', space=vmem, size = 0x2000, scoped, tag = 'input window, operand 0']
    #allocation4 [shape = 's32[2]{0}', space=sflag, size = 0x8, scoped, tag = 'scoped memory for tpu_custom_call.1']
    #allocation5 [shape = 's32[2]{0}', space=sflag, size = 0x8, scoped, tag = 'scoped memory for tpu_custom_call.1']
    #allocation6 [shape = 'u8[131072]{0}', space=vmem, size = 0x20000, scoped, tag = 'input window, operand 1']
    #allocation7 [shape = 's32[2]{0}', space=sflag, size = 0x8, scoped, tag = 'scoped memory for tpu_custom_call.1']
    #allocation8 [shape = 'u8[8192]{0}', space=vmem, size = 0x2000, scoped, tag = 'output window, operand 0']
    %8 = vsyncpa [#allocation4], 0
    %s9 = scalar_lea.sflag [#allocation4], 1
    %10 = vsyncpa %s9, 0
    %11 = vsyncpa [#allocation7], 0
    %s12 = scalar_lea.sflag [#allocation7], 1
    %13 = vsyncpa %s12, 0
    %14 = vsyncpa [#allocation5], 0
    %s15 = scalar_lea.sflag [#allocation5], 1
    %16 = vsyncpa %s15, 0
    loop: start=0, step=1, limit=6
    $region2: #{tpu_custom_call.1} parent=1 // loop_pre_header
      _
    $region3: #{tpu_custom_call.1} parent=1 // loop_header
      %s18 = sphi 0, %s22
      %p19 = scmp.ge.s32.totalorder %s18, 6
      %s25 = sphi 0, %s51
      %s26 = sphi 0, %s47
      %s27 = sphi 0, %s43
      %s28 = sphi 0, %s39
      %s29 = sphi 0, %s25
      %s30 = sphi 0, %s26
      %s31 = sphi 0, %s27
      %s32 = sphi 0, %s28
      %s33 = sphi 0, %s29
      %s34 = sphi 0, %s30
      %s35 = sphi 0, %s31
      %s36 = sphi 0, %s32
      %s58 = sphi 0, %s60
      %s61 = sphi 0, %s58
      %s62 = sphi 0, %s61
      %s78 = sphi 0, %s62
      %s88 = sphi 0, %s90
      %s91 = sphi 0, %s88
      %s92 = sphi 0, %s91
      %s108 = sphi 0, %s92
      %s116 = sphi 0, %s118
      %s119 = sphi 0, %s116
      %s120 = sphi 0, %s119
      %s136 = sphi 0, %s120
      %s146 = sphi 0, %s148
      %s149 = sphi 0, %s146
      %s150 = sphi 0, %s149
      %s166 = sphi 0, %s150
    $region4: #{tpu_custom_call.1} parent=1 // loop_header_branch
      %21 = sbr.rel (%p19) target = $region8
    $region5: #{tpu_custom_call.1} parent=1 // loop_body
      %s23 = ssub.s32 %s18, 1
      %s24 = ssub.s32 %s18, 2
      %s37 = sadd.s32 1, %s28
      %p38 = scmp.ge.s32.totalorder %s37, 1
      %s39 = scalar_select %p38, 0, %s37
      %s40 = sadd.s32 1, %s27
      %s41 = scalar_select %p38, %s40, %s27
      %p42 = scmp.ge.s32.totalorder %s41, 1
      %s43 = scalar_select %p42, 0, %s41
      %s44 = sadd.s32 1, %s26
      %s45 = scalar_select %p42, %s44, %s26
      %p46 = scmp.ge.s32.totalorder %s45, 1
      %s47 = scalar_select %p46, 0, %s45
      %s48 = sadd.s32 1, %s25
      %s49 = scalar_select %p46, %s48, %s25
      %p50 = scmp.ge.s32.totalorder %s49, 4
      %s51 = scalar_select %p50, 0, %s49
      %s52 = ssub.s32 %s25, %s51
      %s53 = ssub.s32 %s27, %s43
      %s54 = sor.u32 %s52, %s53
      %s55 = ssub.s32 %s28, %s39
      %s56 = sor.u32 %s54, %s55
      %p57 = scmp.eq.s32.totalorder %s56, 0
      %s59 = sadd.s32 %s58, 1
      %s60 = scalar_select %p57, %s58, %s59
      %p63 = pneg %p57
      %p64 = scmp.eq.s32.totalorder %s18, 3
      %p65 = por %p63, %p64
      %p66 = scmp.ne.s32.totalorder %s58, %s61
      %p67 = scmp.eq.s32.totalorder %s18, 0
      %p68 = por %p66, %p67
      %p69 = scmp.ne.s32.totalorder %s58, %s61
      %p70 = scmp.eq.s32.totalorder %s23, 3
      %p71 = por %p69, %p70
      %p72 = scmp.ne.s32.totalorder %s61, %s62
      %p73 = scmp.eq.s32.totalorder %s23, 0
      %p74 = por %p72, %p73
      %p75 = scmp.ne.s32.totalorder %s61, %s62
      %p76 = scmp.eq.s32.totalorder %s24, 3
      %p77 = por %p75, %p76
      %p79 = scmp.ne.s32.totalorder %s62, %s78
      %p80 = scmp.eq.s32.totalorder %s24, 0
      %p81 = por %p79, %p80
      %s82 = ssub.s32 %s25, %s51
      %s83 = ssub.s32 %s28, %s39
      %s84 = sor.u32 %s82, %s83
      %s85 = ssub.s32 %s26, %s47
      %s86 = sor.u32 %s84, %s85
      %p87 = scmp.eq.s32.totalorder %s86, 0
      %s89 = sadd.s32 %s88, 1
      %s90 = scalar_select %p87, %s88, %s89
      %p93 = pneg %p87
      %p94 = scmp.eq.s32.totalorder %s18, 3
      %p95 = por %p93, %p94
      %p96 = scmp.ne.s32.totalorder %s88, %s91
      %p97 = scmp.eq.s32.totalorder %s18, 0
      %p98 = por %p96, %p97
      %p99 = scmp.ne.s32.totalorder %s88, %s91
      %p100 = scmp.eq.s32.totalorder %s23, 3
      %p101 = por %p99, %p100
      %p102 = scmp.ne.s32.totalorder %s91, %s92
      %p103 = scmp.eq.s32.totalorder %s23, 0
      %p104 = por %p102, %p103
      %p105 = scmp.ne.s32.totalorder %s91, %s92
      %p106 = scmp.eq.s32.totalorder %s24, 3
      %p107 = por %p105, %p106
      %p109 = scmp.ne.s32.totalorder %s92, %s108
      %p110 = scmp.eq.s32.totalorder %s24, 0
      %p111 = por %p109, %p110
      %s112 = ssub.s32 %s25, %s51
      %s113 = ssub.s32 %s26, %s47
      %s114 = sor.u32 %s112, %s113
      %p115 = scmp.eq.s32.totalorder %s114, 0
      %s117 = sadd.s32 %s116, 1
      %s118 = scalar_select %p115, %s116, %s117
      %p121 = pneg %p115
      %p122 = scmp.eq.s32.totalorder %s18, 3
      %p123 = por %p121, %p122
      %p124 = scmp.ne.s32.totalorder %s116, %s119
      %p125 = scmp.eq.s32.totalorder %s18, 0
      %p126 = por %p124, %p125
      %p127 = scmp.ne.s32.totalorder %s116, %s119
      %p128 = scmp.eq.s32.totalorder %s23, 3
      %p129 = por %p127, %p128
      %p130 = scmp.ne.s32.totalorder %s119, %s120
      %p131 = scmp.eq.s32.totalorder %s23, 0
      %p132 = por %p130, %p131
      %p133 = scmp.ne.s32.totalorder %s119, %s120
      %p134 = scmp.eq.s32.totalorder %s24, 3
      %p135 = por %p133, %p134
      %p137 = scmp.ne.s32.totalorder %s120, %s136
      %p138 = scmp.eq.s32.totalorder %s24, 0
      %p139 = por %p137, %p138
      %s140 = ssub.s32 %s25, %s51
      %s141 = ssub.s32 %s27, %s43
      %s142 = sor.u32 %s140, %s141
      %s143 = ssub.s32 %s26, %s47
      %s144 = sor.u32 %s142, %s143
      %p145 = scmp.eq.s32.totalorder %s144, 0
      %s147 = sadd.s32 %s146, 1
      %s148 = scalar_select %p145, %s146, %s147
      %p151 = pneg %p145
      %p152 = scmp.eq.s32.totalorder %s18, 3
      %p153 = por %p151, %p152
      %p154 = scmp.ne.s32.totalorder %s146, %s149
      %p155 = scmp.eq.s32.totalorder %s18, 0
      %p156 = por %p154, %p155
      %p157 = scmp.ne.s32.totalorder %s146, %s149
      %p158 = scmp.eq.s32.totalorder %s23, 3
      %p159 = por %p157, %p158
      %p160 = scmp.ne.s32.totalorder %s149, %s150
      %p161 = scmp.eq.s32.totalorder %s23, 0
      %p162 = por %p160, %p161
      %p163 = scmp.ne.s32.totalorder %s149, %s150
      %p164 = scmp.eq.s32.totalorder %s24, 3
      %p165 = por %p163, %p164
      %p167 = scmp.ne.s32.totalorder %s150, %s166
      %p168 = scmp.eq.s32.totalorder %s24, 0
      %p169 = por %p167, %p168
      %p170 = scmp.le.s32.totalorder 1, %s18
      %p171 = scmp.lt.s32.totalorder %s18, 5
      %p172 = pnand %p170, %p171
      %p173 = pneg %p172
      // Predicated region
      $region9: #{tpu_custom_call.1} parent=5 // pred_check
        _
      $region10: #{tpu_custom_call.1} parent=5 // pred_check_branch
        %175 = sbr.rel (%p172) target = $region12
      $region11: #{tpu_custom_call.1} parent=5 // pred_region
        %s176 = ssub.s32 %s18, 1
      $region12: #{tpu_custom_call.1} parent=5 // pred_fallthru
        _
      %p177 = scmp.lt.s32.totalorder %s18, 4
      // Predicated region
      $region13: #{tpu_custom_call.1} parent=5 // pred_check
        %p178 = pneg %p177
      $region14: #{tpu_custom_call.1} parent=5 // pred_check_branch
        %180 = sbr.rel (%p178) target = $region16
      $region15: #{tpu_custom_call.1} parent=5 // pred_region
        // Predicated region
        $region17: #{tpu_custom_call.1} parent=15 // pred_check
          %p181 = pneg %p68
        $region18: #{tpu_custom_call.1} parent=15 // pred_check_branch
          %183 = sbr.rel (%p181) target = $region20
        $region19: #{tpu_custom_call.1} parent=15 // pred_region
          %s184 = sand.u32 %s58, 1
          %s185 = scalar_lea.sflag [#allocation4], %s184
          %s186 = sand.u32 %s58, 1
          %s187 = smul.addr %s186, 8
          %s188 = scalar_lea.vmem [#allocation3], %s187
          %s190 = ssub.s32 128, 128
          %191 = vsyncadd %s185, %s190
          %s192 = sadd.s32 %s28, %s27
          %s193 = sadd.s32 %s192, %s25
          %s194 = smul.addr %s193, 128
          %s195 = scalar_lea.hbm %s0, %s194
          %s197 = sshll.u32 %s188, 4
          %s198 = int_to_ptr.vmem [resolvable:$true] %s197
          %200 = dma.hbm_to_vmem [thread:$0]  %s195, 128, %s198, %s185
        $region20: #{tpu_custom_call.1} parent=15 // pred_fallthru
          _
        // Predicated region
        $region21: #{tpu_custom_call.1} parent=15 // pred_check
          %p201 = pneg %p98
        $region22: #{tpu_custom_call.1} parent=15 // pred_check_branch
          %203 = sbr.rel (%p201) target = $region24
        $region23: #{tpu_custom_call.1} parent=15 // pred_region
          %s204 = sand.u32 %s88, 1
          %s205 = scalar_lea.sflag [#allocation7], %s204
          %s206 = sand.u32 %s88, 1
          %s207 = smul.addr %s206, 128
          %s208 = scalar_lea.vmem [#allocation6], %s207
          %s209 = smul.u32 16, %s28
          %s211 = ssub.s32 2048, 2048
          %212 = vsyncadd %s205, %s211
          %s213 = sadd.s32 %s26, %s209
          %s214 = smul.addr %s25, 16
          %s215 = sadd.s32 %s213, %s214
          %s216 = smul.addr %s215, 128
          %s217 = scalar_lea.hbm %s1, %s216
          %s218 = sshll.u32 %s208, 4
          %s219 = int_to_ptr.vmem [resolvable:$true] %s218
          %224 = dma.hbm_to_vmem [thread:$0]  %s217, 2048, %s219, %s205, 128, 128, 8
        $region24: #{tpu_custom_call.1} parent=15 // pred_fallthru
          _
        // Predicated region
        $region25: #{tpu_custom_call.1} parent=15 // pred_check
          %p225 = pneg %p126
        $region26: #{tpu_custom_call.1} parent=15 // pred_check_branch
          %227 = sbr.rel (%p225) target = $region28
        $region27: #{tpu_custom_call.1} parent=15 // pred_region
          %p228 = scmp.lt.s32.totalorder %s25, 3
          %s229 = scalar_select %p228, %s25, 3
          %p230 = scmp.lt.s32.totalorder %s26, 0
          %s231 = scalar_select %p230, %s26, 0
          %s232 = sadd.s32 %s231, %s229
          %s233 = scalar_lea.vmem %s2, %s232
        $region28: #{tpu_custom_call.1} parent=15 // pred_fallthru
          _
      $region16: #{tpu_custom_call.1} parent=5 // pred_fallthru
        _
      %p234 = scmp.le.s32.totalorder 1, %s18
      %p235 = scmp.lt.s32.totalorder %s18, 5
      %p236 = pnand %p234, %p235
      %p237 = pneg %p236
      // Predicated region
      $region29: #{tpu_custom_call.1} parent=5 // pred_check
        _
      $region30: #{tpu_custom_call.1} parent=5 // pred_check_branch
        %239 = sbr.rel (%p236) target = $region32
      $region31: #{tpu_custom_call.1} parent=5 // pred_region
        %s240 = ssub.s32 %s18, 1
        %s241 = sand.u32 %s61, 1
        %s242 = scalar_lea.sflag [#allocation4], %s241
        %s243 = sand.u32 %s61, 1
        %s244 = smul.addr %s243, 8
        %s245 = scalar_lea.vmem [#allocation3], %s244
        // Predicated region
        $region33: #{tpu_custom_call.1} parent=31 // pred_check
          %p246 = pneg %p74
        $region34: #{tpu_custom_call.1} parent=31 // pred_check_branch
          %248 = sbr.rel (%p246) target = $region36
        $region35: #{tpu_custom_call.1} parent=31 // pred_region
          %249 = dma.done %s242, 128
        $region36: #{tpu_custom_call.1} parent=31 // pred_fallthru
          _
        %s250 = sand.u32 %s91, 1
        %s251 = scalar_lea.sflag [#allocation7], %s250
        %s252 = sand.u32 %s91, 1
        %s253 = smul.addr %s252, 128
        %s254 = scalar_lea.vmem [#allocation6], %s253
        // Predicated region
        $region37: #{tpu_custom_call.1} parent=31 // pred_check
          %p255 = pneg %p104
        $region38: #{tpu_custom_call.1} parent=31 // pred_check_branch
          %257 = sbr.rel (%p255) target = $region40
        $region39: #{tpu_custom_call.1} parent=31 // pred_region
          %258 = dma.done %s251, 2048
        $region40: #{tpu_custom_call.1} parent=31 // pred_fallthru
          _
        %s259 = sand.u32 %s61, 1
        %s260 = scalar_lea.sflag [#allocation4], %s259
        %s261 = sand.u32 %s61, 1
        %s262 = smul.addr %s261, 8
        %s263 = scalar_lea.vmem [#allocation3], %s262
        %p264 = pneg %p74
        %p265 = pneg %p71
        %s266 = sand.u32 %s91, 1
        %s267 = scalar_lea.sflag [#allocation7], %s266
        %s268 = sand.u32 %s91, 1
        %s269 = smul.addr %s268, 128
        %s270 = scalar_lea.vmem [#allocation6], %s269
        %p271 = pneg %p104
        %p272 = pneg %p101
        %p273 = scmp.lt.s32.totalorder %s29, 3
        %s274 = scalar_select %p273, %s29, 3
        %p275 = scmp.lt.s32.totalorder %s30, 0
        %s276 = scalar_select %p275, %s30, 0
        %s277 = sadd.s32 %s276, %s274
        %s278 = scalar_lea.vmem %s2, %s277
        %p279 = pneg %p132
        %p280 = pneg %p129
        %p281 = pneg %p162
        %p282 = pneg %p159
        %s283 = sand.u32 %s149, 1
        %s284 = scalar_lea.sflag [#allocation5], %s283
        %s285 = sand.u32 %s149, 1
        %s286 = smul.addr %s285, 8
        %s287 = scalar_lea.vmem [#allocation8], %s286
        %s288 = smul.u32 16, %s32
        %p289 = scmp.lt.s32.totalorder %s29, 3
        %s290 = scalar_select %p289, %s29, 3
        %p291 = scmp.lt.s32.totalorder %s30, 0
        %s292 = scalar_select %p291, %s30, 0
        %s293 = sadd.s32 %s292, %s290
        %s294 = scalar_lea.vmem %s2, %s293
        %p295 = scmp.eq.s32.totalorder %s32, 0
        // Predicated region
        $region41: #{tpu_custom_call.1} parent=31 // pred_check
          %p296 = pneg %p295
        $region42: #{tpu_custom_call.1} parent=31 // pred_check_branch
          %298 = sbr.rel (%p296) target = $region44
        $region43: #{tpu_custom_call.1} parent=31 // pred_region
          %299 = vst [vmem:[#allocation2] sm:$0xff] 0.0
        $region44: #{tpu_custom_call.1} parent=31 // pred_fallthru
          _
        %v300 = vld [vmem:[#allocation2] sm:$0xff]
        %v301 = vld [vmem:[%s245] sm:$0xff]
        %v302 = vld [vmem:[%s254] sm:$0xff]
        %v303 = vld [vmem:[%s254 + $0x8] sm:$0xff]
        %v304 = vld [vmem:[%s254 + $0x10] sm:$0xff]
        %v305 = vld [vmem:[%s254 + $0x18] sm:$0xff]
        %v306 = vld [vmem:[%s254 + $0x20] sm:$0xff]
        %v307 = vld [vmem:[%s254 + $0x28] sm:$0xff]
        %v308 = vld [vmem:[%s254 + $0x30] sm:$0xff]
        %v309 = vld [vmem:[%s254 + $0x38] sm:$0xff]
        %v310 = vld [vmem:[%s254 + $0x40] sm:$0xff]
        %v311 = vld [vmem:[%s254 + $0x48] sm:$0xff]
        %v312 = vld [vmem:[%s254 + $0x50] sm:$0xff]
        %v313 = vld [vmem:[%s254 + $0x58] sm:$0xff]
        %v314 = vld [vmem:[%s254 + $0x60] sm:$0xff]
        %v315 = vld [vmem:[%s254 + $0x68] sm:$0xff]
        %v316 = vld [vmem:[%s254 + $0x70] sm:$0xff]
        %v317 = vld [vmem:[%s254 + $0x78] sm:$0xff]
        %318 = vmatprep.subr.mxu0 0.0
        %319 = vmatpush1.msra.mxu0 %v302
        %320 = vmatprep.subr.mxu0 0.0
        %321 = vmatpush1.msra.mxu0 %v303
        %322 = vmatprep.subr.mxu0 0.0
        %323 = vmatpush1.msra.mxu0 %v304
        %324 = vmatprep.subr.mxu0 0.0
        %325 = vmatpush1.msra.mxu0 %v305
        %326 = vmatprep.subr.mxu0 0.0
        %327 = vmatpush1.msra.mxu0 %v306
        %328 = vmatprep.subr.mxu0 0.0
        %329 = vmatpush1.msra.mxu0 %v307
        %330 = vmatprep.subr.mxu0 0.0
        %331 = vmatpush1.msra.mxu0 %v308
        %332 = vmatprep.subr.mxu0 0.0
        %333 = vmatpush1.msra.mxu0 %v309
        %334 = vmatprep.subr.mxu0 0.0
        %335 = vmatpush1.msra.mxu0 %v310
        %336 = vmatprep.subr.mxu0 0.0
        %337 = vmatpush1.msra.mxu0 %v311
        %338 = vmatprep.subr.mxu0 0.0
        %339 = vmatpush1.msra.mxu0 %v312
        %340 = vmatprep.subr.mxu0 0.0
        %341 = vmatpush1.msra.mxu0 %v313
        %342 = vmatprep.subr.mxu0 0.0
        %343 = vmatpush1.msra.mxu0 %v314
        %344 = vmatprep.subr.mxu0 0.0
        %345 = vmatpush1.msra.mxu0 %v315
        %346 = vmatprep.subr.mxu0 0.0
        %347 = vmatpush1.msra.mxu0 %v316
        %348 = vmatprep.subr.mxu0 0.0
        %349 = vmatpush1.msra.mxu0 %v317
        %350 = vmatprep.subr.mxu0 0.0
        %351 = vmatpush1.msra.mxu0 0.0
        %352 = vmatprep.subr.mxu0 0.0
        %353 = vmatpush1.msra.mxu0 0.0
        %354 = vmatprep.subr.mxu0 0.0
        %355 = vmatpush1.msra.mxu0 0.0
        %356 = vmatprep.subr.mxu0 0.0
        %357 = vmatpush1.msra.mxu0 0.0
        %358 = vmatprep.subr.mxu0 0.0
        %359 = vmatpush1.msra.mxu0 0.0
        %360 = vmatprep.subr.mxu0 0.0
        %361 = vmatpush1.msra.mxu0 0.0
        %362 = vmatprep.subr.mxu0 0.0
        %363 = vmatpush1.msra.mxu0 0.0
        %364 = vmatprep.subr.mxu0 0.0
        %365 = vmatpush1.msra.mxu0 0.0
        %366 = vmatprep.subr.mxu0 0.0
        %367 = vmatpush1.msra.mxu0 0.0
        %368 = vmatprep.subr.mxu0 0.0
        %369 = vmatpush1.msra.mxu0 0.0
        %370 = vmatprep.subr.mxu0 0.0
        %371 = vmatpush1.msra.mxu0 0.0
        %372 = vmatprep.subr.mxu0 0.0
        %373 = vmatpush1.msra.mxu0 0.0
        %374 = vmatprep.subr.mxu0 0.0
        %375 = vmatpush1.msra.mxu0 0.0
        %376 = vmatprep.subr.mxu0 0.0
        %377 = vmatpush1.msra.mxu0 0.0
        %378 = vmatprep.subr.mxu0 0.0
        %379 = vmatpush1.msra.mxu0 0.0
        %380 = vmatprep.subr.mxu0 0.0
        %381 = vmatpush1.msra.mxu0 0.0
        %382 = vmatprep.mubr.f32.mxu0 0.0
        %383 = vmatmul.mubr.f32.gmra.mrb[0].mxu0 %v301
        %v384 = vpop.f32.mrb[0].mxu0
        %v385 = vadd.f32 0.0, %v384
        %v386 = vpop.f32.mrb[0].mxu0
        %387 = vdwg.mxu0
        %v388 = vadd.f32 %v300, %v385
        %389 = vst [vmem:[#allocation2] sm:$0xff] %v388
        // Predicated region
        $region45: #{tpu_custom_call.1} parent=31 // pred_check
          %p390 = pneg %p295
        $region46: #{tpu_custom_call.1} parent=31 // pred_check_branch
          %392 = sbr.rel (%p390) target = $region48
        $region47: #{tpu_custom_call.1} parent=31 // pred_region
          %v393 = vld [vmem:[#allocation2] sm:$0xff]
          %v394 = vld [vmem:[%s294] sm:$0x1]
          %v396 = vlaneseq
          %v397 = vshrl.u32 %v396, 7
          %v398 = vsub.s32 0, %v397
          %v399 = vrot.slane %v394, %v398
          %v401 = vadd.f32 %v393, %v399
          %v402 = vmax.f32 %v401, 0.0
          %403 = vst [vmem:[%s287] sm:$0xff] %v402
        $region48: #{tpu_custom_call.1} parent=31 // pred_fallthru
          _
        %s404 = sand.u32 %s149, 1
        %s405 = scalar_lea.sflag [#allocation5], %s404
        %s406 = sand.u32 %s149, 1
        %s407 = smul.addr %s406, 8
        %s408 = scalar_lea.vmem [#allocation8], %s407
        // Predicated region
        $region49: #{tpu_custom_call.1} parent=31 // pred_check
          %p409 = pneg %p159
        $region50: #{tpu_custom_call.1} parent=31 // pred_check_branch
          %411 = sbr.rel (%p409) target = $region52
        $region51: #{tpu_custom_call.1} parent=31 // pred_region
          %s413 = ssub.s32 128, 128
          %414 = vsyncadd %s405, %s413
          %s415 = sadd.s32 %s30, %s31
          %s416 = sadd.s32 %s415, %s29
          %s417 = smul.addr %s416, 128
          %s418 = scalar_lea.hbm %s3, %s417
          %s420 = sshll.u32 %s408, 4
          %s421 = int_to_ptr.vmem [resolvable:$true] %s420
          %423 = dma.vmem_to_hbm [thread:$0]  %s421, 128, %s418, %s405
        $region52: #{tpu_custom_call.1} parent=31 // pred_fallthru
          _
      $region32: #{tpu_custom_call.1} parent=5 // pred_fallthru
        _
      %p424 = scmp.le.s32.totalorder 2, %s18
      // Predicated region
      $region53: #{tpu_custom_call.1} parent=5 // pred_check
        %p425 = pneg %p424
      $region54: #{tpu_custom_call.1} parent=5 // pred_check_branch
        %427 = sbr.rel (%p425) target = $region56
      $region55: #{tpu_custom_call.1} parent=5 // pred_region
        %s428 = ssub.s32 %s18, 2
        // Predicated region
        $region57: #{tpu_custom_call.1} parent=55 // pred_check
          %p429 = pneg %p165
        $region58: #{tpu_custom_call.1} parent=55 // pred_check_branch
          %431 = sbr.rel (%p429) target = $region60
        $region59: #{tpu_custom_call.1} parent=55 // pred_region
          %s432 = sand.u32 %s150, 1
          %s433 = scalar_lea.sflag [#allocation5], %s432
          %s434 = sand.u32 %s150, 1
          %s435 = smul.addr %s434, 8
          %s436 = scalar_lea.vmem [#allocation8], %s435
          %437 = dma.done %s433, 128
        $region60: #{tpu_custom_call.1} parent=55 // pred_fallthru
          _
      $region56: #{tpu_custom_call.1} parent=5 // pred_fallthru
        _
    $region6: #{tpu_custom_call.1} parent=1 // loop_footer
      %s22 = sadd.s32 1, %s18
    $region7: #{tpu_custom_call.1} parent=1 // loop_footer_branch
      %17 = sbr.rel target = $region3
    $region8: #{tpu_custom_call.1} parent=1 // loop_exit
      _
    %438 = vsyncpa [#allocation4], 1
    %s439 = scalar_lea.sflag [#allocation4], 1
    %440 = vsyncpa %s439, 1
    %441 = vsyncpa [#allocation7], 1
    %s442 = scalar_lea.sflag [#allocation7], 1
    %443 = vsyncpa %s442, 1
    %444 = vsyncpa [#allocation5], 1
    %s445 = scalar_lea.sflag [#allocation5], 1
    %446 = vsyncpa %s445, 1

</llo_original>
